<compile_context>
chip_gen: v7x
topology: tpu7x:2x2x1
jax: 0.10.0
libtpu: 0.0.40
codegen_flags: <defaults>
</compile_context>

<pallas_src>
import jax
import jax.numpy as jnp
from jax.experimental import pallas as pl
from jax.experimental.pallas import tpu as pltpu


def permute_mul_kernel(x_ref, s_ref, o_ref):
    # x_ref: (HW, Cc)  one batch image, one channel chunk, channels on lanes
    # s_ref: (1,  Cc)  per-channel layer scale for this chunk
    # o_ref: (Cc, HW)  channel-major (permuted) output slab for this chunk
    y = x_ref[...] * s_ref[...]              # broadcast scale across spatial rows (VPU)
    o_ref[...] = jnp.transpose(y, (1, 0))    # [0,3,1,2] permute == per-image 2-D transpose (XLU)


def permute_mul(x_nhwc, scale_c, *, reshape_4d=True):
    """x_nhwc: (N, H, W, C) float32; scale_c: (C,) float32 -> (N, C, H, W)
    (or (N, C, H*W) when reshape_4d=False)."""
    N, H, W, C = x_nhwc.shape
    HW = H * W

    # 2-way lane-aligned channel split when possible (768 -> 2 x 384):
    #   * v7x: both TensorCores get a chunk ("parallel" grid axes).
    #   * v5e: successive chunks let input DMA / XLU transpose / output DMA overlap.
    # Don't split finer than 2 — at ~300 KB/chunk the ~0.35 us/step overhead
    # starts to dominate.
    c_steps = 2 if (C % 256 == 0) else 1
    Cc = C // c_steps

    x3 = x_nhwc.reshape(N, HW, C)   # no data reordering across C
    s2 = scale_c.reshape(1, C)

    elem_bytes = jnp.dtype(x_nhwc.dtype).itemsize
    cost = pl.CostEstimate(
        flops=N * HW * C,  # one multiply per element
        transcendentals=0,
        bytes_accessed=2 * N * HW * C * elem_bytes + C * elem_bytes,
    )

    out = pl.pallas_call(
        permute_mul_kernel,
        out_shape=jax.ShapeDtypeStruct((N, C, HW), x_nhwc.dtype),
        grid=(N, c_steps),
        in_specs=[
            # whole (HW, Cc) slab per (image, channel-chunk); batch dim squeezed
            pl.BlockSpec((None, HW, Cc), lambda n, c: (n, 0, c)),
            # matching channel chunk of the scale vector
            pl.BlockSpec((1, Cc), lambda n, c: (0, c)),
        ],
        out_specs=pl.BlockSpec((None, Cc, HW), lambda n, c: (n, c, 0)),
        compiler_params=pltpu.CompilerParams(
            dimension_semantics=("parallel", "parallel"),
        ),
        cost_estimate=cost,
    )(x3, s2)

    if not reshape_4d:
        # Lane-dense (N, C, HW) slab — strictly cheaper for downstream ops.
        return out
    # Module semantics require (N, C, H, W); note: on TPU this logical view may
    # materialize a relayout copy because of (…,14,14) minor-dim tiling.
    return out.reshape(N, C, H, W)


if __name__ == "__main__":
    key = jax.random.PRNGKey(0)
    kx, ks = jax.random.split(key)

    # Shapes from the module: x344 is (1, 14, 14, 768), layer_scale is (768, 1, 1).
    N, H, W, C = 1, 14, 14, 768
    x = jax.random.normal(kx, (N, H, W, C), dtype=jnp.float32)
    layer_scale = jax.random.uniform(ks, (C, 1, 1), dtype=jnp.float32)  # torch.rand -> U[0,1)

    out = permute_mul(x, layer_scale.reshape(C))
    out = jax.block_until_ready(out)

    # Pure-JAX reference: permute(0,3,1,2) then broadcast-multiply by (C,1,1) scale.
    ref = jnp.transpose(x, (0, 3, 1, 2)) * layer_scale[None]

    assert out.shape == (N, C, H, W), out.shape
    assert out.dtype == jnp.float32
    assert jnp.allclose(out, ref, atol=1e-6, rtol=1e-6), "mismatch vs reference"

    print("KERNEL_OK")
</pallas_src>

<mosaic_0001>
module attributes {stable_mosaic.version = 11 : i64} {
  func.func @permute_mul_kernel(%arg0: i32, %arg1: i32, %arg2: memref<1x196x384xf32, #tpu.memory_space<vmem>>, %arg3: memref<1x384xf32, #tpu.memory_space<vmem>>, %arg4: memref<1x384x196xf32, #tpu.memory_space<vmem>>) attributes {dimension_semantics = [#tpu.dimension_semantics<parallel>, #tpu.dimension_semantics<parallel>], iteration_bounds = array<i64: 1, 2>, scalar_prefetch = 0 : i64, scratch_operands = 0 : i64, tpu.core_type = #tpu.core_type<tc>, window_params = [{transform_indices = @transform_0, window_bounds = array<i64: 1, 196, 384>}, {transform_indices = @transform_1, window_bounds = array<i64: 1, 384>}, {transform_indices = @transform_2, window_bounds = array<i64: 1, 384, 196>}]} {
    %c0 = arith.constant 0 : index
    %c0_0 = arith.constant 0 : index
    %c0_1 = arith.constant 0 : index
    %0 = vector.load %arg2[%c0, %c0_0, %c0_1] : memref<1x196x384xf32, #tpu.memory_space<vmem>>, vector<1x196x384xf32>
    %1 = vector.shape_cast %0 : vector<1x196x384xf32> to vector<196x384xf32>
    %c0_2 = arith.constant 0 : index
    %c0_3 = arith.constant 0 : index
    %2 = vector.load %arg3[%c0_2, %c0_3] : memref<1x384xf32, #tpu.memory_space<vmem>>, vector<1x384xf32>
    %3 = vector.broadcast %2 : vector<1x384xf32> to vector<196x384xf32>
    %4 = arith.mulf %1, %3 : vector<196x384xf32>
    %5 = tpu.transpose %4, [1, 0] : vector<196x384xf32> -> vector<384x196xf32>
    %c0_4 = arith.constant 0 : index
    %c0_5 = arith.constant 0 : index
    %c0_6 = arith.constant 0 : index
    %6 = vector.load %arg4[%c0_4, %c0_5, %c0_6] : memref<1x384x196xf32, #tpu.memory_space<vmem>>, vector<1x384x196xf32>
    %7 = vector.shape_cast %6 : vector<1x384x196xf32> to vector<384x196xf32>
    %8 = vector.shape_cast %5 : vector<384x196xf32> to vector<1x384x196xf32>
    tpu.vector_store %arg4[%c0_4, %c0_5, %c0_6], %8 {strides = array<i32>} : memref<1x384x196xf32, #tpu.memory_space<vmem>>, vector<1x384x196xf32>,
    return
  }
  func.func @transform_0(%arg0: i32, %arg1: i32) -> (i32, i32, i32) {
    %c0_i32 = arith.constant 0 : i32
    %c0_i32_0 = arith.constant 0 : i32
    return %arg0, %c0_i32, %arg1 : i32, i32, i32
  }
  func.func @transform_1(%arg0: i32, %arg1: i32) -> (i32, i32) {
    %c0_i32 = arith.constant 0 : i32
    %c0_i32_0 = arith.constant 0 : i32
    return %c0_i32, %arg1 : i32, i32
  }
  func.func @transform_2(%arg0: i32, %arg1: i32) -> (i32, i32, i32) {
    %c0_i32 = arith.constant 0 : i32
    %c0_i32_0 = arith.constant 0 : i32
    return %arg0, %arg1, %c0_i32 : i32, i32, i32
  }
}

</mosaic_0001>

<llo_original>
// kernel: tpu_custom_call.1
$region0: #{tpu_custom_call.1}
  #allocation0 [shape = 'u32[]', space=smem, size = 0x4, offset = 0x4, fixed_abs, tag = 'smem constant byte address 0x4 - core index']
  #allocation1 [shape = 'u32[144,128]{1,0:T(1,128)}', space=vmem, size = 0x12000, scoped, tag = 'internal scratch']
  %s0 = inlined_call_operand.vmem [shape: f32[1,196,768], index: 0, kind: input, shape index: {}]
  %s1 = inlined_call_operand.vmem [shape: f32[1,768], index: 1, kind: input, shape index: {}]
  %s2 = inlined_call_operand.vmem [shape: f32[1,768,196], index: 2, kind: output, shape index: {}]
  %s3 = sld [smem:[#allocation0]]
  $region64: #{tpu_custom_call.1} parent=0
    _
  %s5 = ssub.s32 1, %s3
  %s6 = scalar_select 0, %s5, %s3
  $region1: #{tpu_custom_call.1} parent=0
    #allocation2 [shape = 'u8[614400]{0}', space=vmem, size = 0x96000, scoped, tag = 'input window, operand 0']
    loop: start=0, step=1, limit=4
    $region2: #{tpu_custom_call.1} parent=1 // loop_pre_header
      _
    $region3: #{tpu_custom_call.1} parent=1 // loop_header
      %s8 = sphi 0, %s12
      %p9 = scmp.ge.s32.totalorder %s8, 4
      %s15 = sphi 0, %s27
      %s16 = sphi 0, %s23
      %s17 = sphi 0, %s15
      %s18 = sphi 0, %s16
      %s19 = sphi 0, %s17
      %s20 = sphi 0, %s18
      %s32 = sphi 0, %s34
      %s35 = sphi 0, %s32
      %s36 = sphi 0, %s35
      %s52 = sphi 0, %s36
      %s58 = sphi 0, %s60
      %s61 = sphi 0, %s58
      %s62 = sphi 0, %s61
      %s78 = sphi 0, %s62
      %s86 = sphi 0, %s88
      %s89 = sphi 0, %s86
      %s90 = sphi 0, %s89
      %s106 = sphi 0, %s90
    $region4: #{tpu_custom_call.1} parent=1 // loop_header_branch
      %11 = sbr.rel (%p9) target = $region8
    $region5: #{tpu_custom_call.1} parent=1 // loop_body
      %s13 = ssub.s32 %s8, 1
      %s14 = ssub.s32 %s8, 2
      %s21 = sadd.s32 1, %s16
      %p22 = scmp.ge.s32.totalorder %s21, 2
      %s23 = scalar_select %p22, 0, %s21
      %s24 = sadd.s32 1, %s15
      %s25 = scalar_select %p22, %s24, %s15
      %p26 = scmp.ge.s32.totalorder %s25, 1
      %s27 = scalar_select %p26, 0, %s25
      %s28 = ssub.s32 %s15, %s27
      %s29 = ssub.s32 %s16, %s23
      %s30 = sor.u32 %s28, %s29
      %p31 = scmp.eq.s32.totalorder %s30, 0
      %s33 = sadd.s32 %s32, 1
      %s34 = scalar_select %p31, %s32, %s33
      %p37 = pneg %p31
      %p38 = scmp.eq.s32.totalorder %s8, 1
      %p39 = por %p37, %p38
      %p40 = scmp.ne.s32.totalorder %s32, %s35
      %p41 = scmp.eq.s32.totalorder %s8, 0
      %p42 = por %p40, %p41
      %p43 = scmp.ne.s32.totalorder %s32, %s35
      %p44 = scmp.eq.s32.totalorder %s13, 1
      %p45 = por %p43, %p44
      %p46 = scmp.ne.s32.totalorder %s35, %s36
      %p47 = scmp.eq.s32.totalorder %s13, 0
      %p48 = por %p46, %p47
      %p49 = scmp.ne.s32.totalorder %s35, %s36
      %p50 = scmp.eq.s32.totalorder %s14, 1
      %p51 = por %p49, %p50
      %p53 = scmp.ne.s32.totalorder %s36, %s52
      %p54 = scmp.eq.s32.totalorder %s14, 0
      %p55 = por %p53, %p54
      %s56 = ssub.s32 %s16, %s23
      %p57 = scmp.eq.s32.totalorder %s56, 0
      %s59 = sadd.s32 %s58, 1
      %s60 = scalar_select %p57, %s58, %s59
      %p63 = pneg %p57
      %p64 = scmp.eq.s32.totalorder %s8, 1
      %p65 = por %p63, %p64
      %p66 = scmp.ne.s32.totalorder %s58, %s61
      %p67 = scmp.eq.s32.totalorder %s8, 0
      %p68 = por %p66, %p67
      %p69 = scmp.ne.s32.totalorder %s58, %s61
      %p70 = scmp.eq.s32.totalorder %s13, 1
      %p71 = por %p69, %p70
      %p72 = scmp.ne.s32.totalorder %s61, %s62
      %p73 = scmp.eq.s32.totalorder %s13, 0
      %p74 = por %p72, %p73
      %p75 = scmp.ne.s32.totalorder %s61, %s62
      %p76 = scmp.eq.s32.totalorder %s14, 1
      %p77 = por %p75, %p76
      %p79 = scmp.ne.s32.totalorder %s62, %s78
      %p80 = scmp.eq.s32.totalorder %s14, 0
      %p81 = por %p79, %p80
      %s82 = ssub.s32 %s15, %s27
      %s83 = ssub.s32 %s16, %s23
      %s84 = sor.u32 %s82, %s83
      %p85 = scmp.eq.s32.totalorder %s84, 0
      %s87 = sadd.s32 %s86, 1
      %s88 = scalar_select %p85, %s86, %s87
      %p91 = pneg %p85
      %p92 = scmp.eq.s32.totalorder %s8, 1
      %p93 = por %p91, %p92
      %p94 = scmp.ne.s32.totalorder %s86, %s89
      %p95 = scmp.eq.s32.totalorder %s8, 0
      %p96 = por %p94, %p95
      %p97 = scmp.ne.s32.totalorder %s86, %s89
      %p98 = scmp.eq.s32.totalorder %s13, 1
      %p99 = por %p97, %p98
      %p100 = scmp.ne.s32.totalorder %s89, %s90
      %p101 = scmp.eq.s32.totalorder %s13, 0
      %p102 = por %p100, %p101
      %p103 = scmp.ne.s32.totalorder %s89, %s90
      %p104 = scmp.eq.s32.totalorder %s14, 1
      %p105 = por %p103, %p104
      %p107 = scmp.ne.s32.totalorder %s90, %s106
      %p108 = scmp.eq.s32.totalorder %s14, 0
      %p109 = por %p107, %p108
      %p110 = scmp.le.s32.totalorder 1, %s8
      %p111 = scmp.lt.s32.totalorder %s8, 3
      %p112 = pnand %p110, %p111
      %p113 = pneg %p112
      // Predicated region
      $region9: #{tpu_custom_call.1} parent=5 // pred_check
        _
      $region10: #{tpu_custom_call.1} parent=5 // pred_check_branch
        %115 = sbr.rel (%p112) target = $region12
      $region11: #{tpu_custom_call.1} parent=5 // pred_region
        %s116 = ssub.s32 %s8, 1
      $region12: #{tpu_custom_call.1} parent=5 // pred_fallthru
        _
      %p117 = scmp.lt.s32.totalorder %s8, 2
      // Predicated region
      $region13: #{tpu_custom_call.1} parent=5 // pred_check
        %p118 = pneg %p117
      $region14: #{tpu_custom_call.1} parent=5 // pred_check_branch
        %120 = sbr.rel (%p118) target = $region16
      $region15: #{tpu_custom_call.1} parent=5 // pred_region
        // Predicated region
        $region17: #{tpu_custom_call.1} parent=15 // pred_check
          %p121 = pneg %p42
        $region18: #{tpu_custom_call.1} parent=15 // pred_check_branch
          %123 = sbr.rel (%p121) target = $region20
        $region19: #{tpu_custom_call.1} parent=15 // pred_region
          %s124 = sand.u32 %s32, 1
          %s125 = sand.u32 %s32, 1
          %s126 = smul.addr %s125, 600
          %s127 = scalar_lea.vmem [#allocation2], %s126
          %s128 = smul.u32 3, %s16
          %s129 = smul.addr %s15, 150
          %s130 = sadd.s32 %s128, %s129
          %s131 = smul.addr %s130, 8
          %s132 = scalar_lea.vmem %s0, %s131
          // Predicated region
          $region21: #{tpu_custom_call.1} parent=19 // pred_check
            _
          $region22: #{tpu_custom_call.1} parent=19 // pred_check_branch
            %134 = sbr.rel (0) target = $region24
          $region23: #{tpu_custom_call.1} parent=19 // pred_region
            // Predicated region
            $region25: #{tpu_custom_call.1} parent=23 // pred_check
              _
            $region26: #{tpu_custom_call.1} parent=23 // pred_check_branch
              %136 = sbr.rel (0) target = $region28
            $region27: #{tpu_custom_call.1} parent=23 // pred_region
              loop: start=0, step=1, limit=1
              $region29: #{tpu_custom_call.1} parent=27 // loop_pre_header
                _
              $region30: #{tpu_custom_call.1} parent=27 // loop_header
                %s138 = sphi 0, %s142
                %p139 = scmp.ge.s32.totalorder %s138, 1
                %s143 = sphi %s132, %s132
                %s144 = sphi %s127, %s127
              $region31: #{tpu_custom_call.1} parent=27 // loop_header_branch
                %141 = sbr.rel (%p139) target = $region35
              $region32: #{tpu_custom_call.1} parent=27 // loop_body
                %v145 = vld [vmem:[%s143] sm:$0xff]
                %146 = vst [vmem:[%s144] sm:$0xff] %v145
                %v147 = vld [vmem:[%s143 + $0x8] sm:$0xff]
                %148 = vst [vmem:[%s144 + $0x8] sm:$0xff] %v147
                %v149 = vld [vmem:[%s143 + $0x10] sm:$0xff]
                %150 = vst [vmem:[%s144 + $0x10] sm:$0xff] %v149
                %v151 = vld [vmem:[%s143 + $0x30] sm:$0xff]
                %152 = vst [vmem:[%s144 + $0x18] sm:$0xff] %v151
                %v153 = vld [vmem:[%s143 + $0x38] sm:$0xff]
                %154 = vst [vmem:[%s144 + $0x20] sm:$0xff] %v153
                %v155 = vld [vmem:[%s143 + $0x40] sm:$0xff]
                %156 = vst [vmem:[%s144 + $0x28] sm:$0xff] %v155
                %v157 = vld [vmem:[%s143 + $0x60] sm:$0xff]
                %158 = vst [vmem:[%s144 + $0x30] sm:$0xff] %v157
                %v159 = vld [vmem:[%s143 + $0x68] sm:$0xff]
                %160 = vst [vmem:[%s144 + $0x38] sm:$0xff] %v159
                %v161 = vld [vmem:[%s143 + $0x70] sm:$0xff]
                %162 = vst [vmem:[%s144 + $0x40] sm:$0xff] %v161
                %v163 = vld [vmem:[%s143 + $0x90] sm:$0xff]
                %164 = vst [vmem:[%s144 + $0x48] sm:$0xff] %v163
                %v165 = vld [vmem:[%s143 + $0x98] sm:$0xff]
                %166 = vst [vmem:[%s144 + $0x50] sm:$0xff] %v165
                %v167 = vld [vmem:[%s143 + $0xa0] sm:$0xff]
                %168 = vst [vmem:[%s144 + $0x58] sm:$0xff] %v167
                %v169 = vld [vmem:[%s143 + $0xc0] sm:$0xff]
                %170 = vst [vmem:[%s144 + $0x60] sm:$0xff] %v169
                %v171 = vld [vmem:[%s143 + $0xc8] sm:$0xff]
                %172 = vst [vmem:[%s144 + $0x68] sm:$0xff] %v171
                %v173 = vld [vmem:[%s143 + $0xd0] sm:$0xff]
                %174 = vst [vmem:[%s144 + $0x70] sm:$0xff] %v173
                %v175 = vld [vmem:[%s143 + $0xf0] sm:$0xff]
                %176 = vst [vmem:[%s144 + $0x78] sm:$0xff] %v175
                %v177 = vld [vmem:[%s143 + $0xf8] sm:$0xff]
                %178 = vst [vmem:[%s144 + $0x80] sm:$0xff] %v177
                %v179 = vld [vmem:[%s143 + $0x100] sm:$0xff]
                %180 = vst [vmem:[%s144 + $0x88] sm:$0xff] %v179
                %v181 = vld [vmem:[%s143 + $0x120] sm:$0xff]
                %182 = vst [vmem:[%s144 + $0x90] sm:$0xff] %v181
                %v183 = vld [vmem:[%s143 + $0x128] sm:$0xff]
                %184 = vst [vmem:[%s144 + $0x98] sm:$0xff] %v183
                %v185 = vld [vmem:[%s143 + $0x130] sm:$0xff]
                %186 = vst [vmem:[%s144 + $0xa0] sm:$0xff] %v185
                %v187 = vld [vmem:[%s143 + $0x150] sm:$0xff]
                %188 = vst [vmem:[%s144 + $0xa8] sm:$0xff] %v187
                %v189 = vld [vmem:[%s143 + $0x158] sm:$0xff]
                %190 = vst [vmem:[%s144 + $0xb0] sm:$0xff] %v189
                %v191 = vld [vmem:[%s143 + $0x160] sm:$0xff]
                %192 = vst [vmem:[%s144 + $0xb8] sm:$0xff] %v191
                %v193 = vld [vmem:[%s143 + $0x180] sm:$0xff]
                %194 = vst [vmem:[%s144 + $0xc0] sm:$0xff] %v193
                %v195 = vld [vmem:[%s143 + $0x188] sm:$0xff]
                %196 = vst [vmem:[%s144 + $0xc8] sm:$0xff] %v195
                %v197 = vld [vmem:[%s143 + $0x190] sm:$0xff]
                %198 = vst [vmem:[%s144 + $0xd0] sm:$0xff] %v197
                %v199 = vld [vmem:[%s143 + $0x1b0] sm:$0xff]
                %200 = vst [vmem:[%s144 + $0xd8] sm:$0xff] %v199
                %v201 = vld [vmem:[%s143 + $0x1b8] sm:$0xff]
                %202 = vst [vmem:[%s144 + $0xe0] sm:$0xff] %v201
                %v203 = vld [vmem:[%s143 + $0x1c0] sm:$0xff]
                %204 = vst [vmem:[%s144 + $0xe8] sm:$0xff] %v203
                %v205 = vld [vmem:[%s143 + $0x1e0] sm:$0xff]
                %206 = vst [vmem:[%s144 + $0xf0] sm:$0xff] %v205
                %v207 = vld [vmem:[%s143 + $0x1e8] sm:$0xff]
                %208 = vst [vmem:[%s144 + $0xf8] sm:$0xff] %v207
                %v209 = vld [vmem:[%s143 + $0x1f0] sm:$0xff]
                %210 = vst [vmem:[%s144 + $0x100] sm:$0xff] %v209
                %v211 = vld [vmem:[%s143 + $0x210] sm:$0xff]
                %212 = vst [vmem:[%s144 + $0x108] sm:$0xff] %v211
                %v213 = vld [vmem:[%s143 + $0x218] sm:$0xff]
                %214 = vst [vmem:[%s144 + $0x110] sm:$0xff] %v213
                %v215 = vld [vmem:[%s143 + $0x220] sm:$0xff]
                %216 = vst [vmem:[%s144 + $0x118] sm:$0xff] %v215
                %v217 = vld [vmem:[%s143 + $0x240] sm:$0xff]
                %218 = vst [vmem:[%s144 + $0x120] sm:$0xff] %v217
                %v219 = vld [vmem:[%s143 + $0x248] sm:$0xff]
                %220 = vst [vmem:[%s144 + $0x128] sm:$0xff] %v219
                %v221 = vld [vmem:[%s143 + $0x250] sm:$0xff]
                %222 = vst [vmem:[%s144 + $0x130] sm:$0xff] %v221
                %v223 = vld [vmem:[%s143 + $0x270] sm:$0xff]
                %224 = vst [vmem:[%s144 + $0x138] sm:$0xff] %v223
                %v225 = vld [vmem:[%s143 + $0x278] sm:$0xff]
                %226 = vst [vmem:[%s144 + $0x140] sm:$0xff] %v225
                %v227 = vld [vmem:[%s143 + $0x280] sm:$0xff]
                %228 = vst [vmem:[%s144 + $0x148] sm:$0xff] %v227
                %v229 = vld [vmem:[%s143 + $0x2a0] sm:$0xff]
                %230 = vst [vmem:[%s144 + $0x150] sm:$0xff] %v229
                %v231 = vld [vmem:[%s143 + $0x2a8] sm:$0xff]
                %232 = vst [vmem:[%s144 + $0x158] sm:$0xff] %v231
                %v233 = vld [vmem:[%s143 + $0x2b0] sm:$0xff]
                %234 = vst [vmem:[%s144 + $0x160] sm:$0xff] %v233
                %v235 = vld [vmem:[%s143 + $0x2d0] sm:$0xff]
                %236 = vst [vmem:[%s144 + $0x168] sm:$0xff] %v235
                %v237 = vld [vmem:[%s143 + $0x2d8] sm:$0xff]
                %238 = vst [vmem:[%s144 + $0x170] sm:$0xff] %v237
                %v239 = vld [vmem:[%s143 + $0x2e0] sm:$0xff]
                %240 = vst [vmem:[%s144 + $0x178] sm:$0xff] %v239
                %v241 = vld [vmem:[%s143 + $0x300] sm:$0xff]
                %242 = vst [vmem:[%s144 + $0x180] sm:$0xff] %v241
                %v243 = vld [vmem:[%s143 + $0x308] sm:$0xff]
                %244 = vst [vmem:[%s144 + $0x188] sm:$0xff] %v243
                %v245 = vld [vmem:[%s143 + $0x310] sm:$0xff]
                %246 = vst [vmem:[%s144 + $0x190] sm:$0xff] %v245
                %v247 = vld [vmem:[%s143 + $0x330] sm:$0xff]
                %248 = vst [vmem:[%s144 + $0x198] sm:$0xff] %v247
                %v249 = vld [vmem:[%s143 + $0x338] sm:$0xff]
                %250 = vst [vmem:[%s144 + $0x1a0] sm:$0xff] %v249
                %v251 = vld [vmem:[%s143 + $0x340] sm:$0xff]
                %252 = vst [vmem:[%s144 + $0x1a8] sm:$0xff] %v251
                %v253 = vld [vmem:[%s143 + $0x360] sm:$0xff]
                %254 = vst [vmem:[%s144 + $0x1b0] sm:$0xff] %v253
                %v255 = vld [vmem:[%s143 + $0x368] sm:$0xff]
                %256 = vst [vmem:[%s144 + $0x1b8] sm:$0xff] %v255
                %v257 = vld [vmem:[%s143 + $0x370] sm:$0xff]
                %258 = vst [vmem:[%s144 + $0x1c0] sm:$0xff] %v257
                %v259 = vld [vmem:[%s143 + $0x390] sm:$0xff]
                %260 = vst [vmem:[%s144 + $0x1c8] sm:$0xff] %v259
                %v261 = vld [vmem:[%s143 + $0x398] sm:$0xff]
                %262 = vst [vmem:[%s144 + $0x1d0] sm:$0xff] %v261
                %v263 = vld [vmem:[%s143 + $0x3a0] sm:$0xff]
                %264 = vst [vmem:[%s144 + $0x1d8] sm:$0xff] %v263
                %v265 = vld [vmem:[%s143 + $0x3c0] sm:$0xff]
                %266 = vst [vmem:[%s144 + $0x1e0] sm:$0xff] %v265
                %v267 = vld [vmem:[%s143 + $0x3c8] sm:$0xff]
                %268 = vst [vmem:[%s144 + $0x1e8] sm:$0xff] %v267
                %v269 = vld [vmem:[%s143 + $0x3d0] sm:$0xff]
                %270 = vst [vmem:[%s144 + $0x1f0] sm:$0xff] %v269
                %v271 = vld [vmem:[%s143 + $0x3f0] sm:$0xff]
                %272 = vst [vmem:[%s144 + $0x1f8] sm:$0xff] %v271
                %v273 = vld [vmem:[%s143 + $0x3f8] sm:$0xff]
                %274 = vst [vmem:[%s144 + $0x200] sm:$0xff] %v273
                %v275 = vld [vmem:[%s143 + $0x400] sm:$0xff]
                %276 = vst [vmem:[%s144 + $0x208] sm:$0xff] %v275
                %v277 = vld [vmem:[%s143 + $0x420] sm:$0xff]
                %278 = vst [vmem:[%s144 + $0x210] sm:$0xff] %v277
                %v279 = vld [vmem:[%s143 + $0x428] sm:$0xff]
                %280 = vst [vmem:[%s144 + $0x218] sm:$0xff] %v279
                %v281 = vld [vmem:[%s143 + $0x430] sm:$0xff]
                %282 = vst [vmem:[%s144 + $0x220] sm:$0xff] %v281
                %v283 = vld [vmem:[%s143 + $0x450] sm:$0xff]
                %284 = vst [vmem:[%s144 + $0x228] sm:$0xff] %v283
                %v285 = vld [vmem:[%s143 + $0x458] sm:$0xff]
                %286 = vst [vmem:[%s144 + $0x230] sm:$0xff] %v285
                %v287 = vld [vmem:[%s143 + $0x460] sm:$0xff]
                %288 = vst [vmem:[%s144 + $0x238] sm:$0xff] %v287
                %v289 = vld [vmem:[%s143 + $0x480] sm:$0xff]
                %290 = vst [vmem:[%s144 + $0x240] sm:$0xff] %v289
                %v291 = vld [vmem:[%s143 + $0x488] sm:$0xff]
                %292 = vst [vmem:[%s144 + $0x248] sm:$0xff] %v291
                %v293 = vld [vmem:[%s143 + $0x490] sm:$0xff]
                %294 = vst [vmem:[%s144 + $0x250] sm:$0xff] %v293
              $region33: #{tpu_custom_call.1} parent=27 // loop_footer
                %s142 = sadd.s32 1, %s138
              $region34: #{tpu_custom_call.1} parent=27 // loop_footer_branch
                %137 = sbr.rel target = $region30
              $region35: #{tpu_custom_call.1} parent=27 // loop_exit
                _
            $region28: #{tpu_custom_call.1} parent=23 // pred_fallthru
              _
            // Predicated region
            $region36: #{tpu_custom_call.1} parent=23 // pred_check
              _
            $region37: #{tpu_custom_call.1} parent=23 // pred_check_branch
              %296 = sbr.rel target = $region39
            $region38: #{tpu_custom_call.1} parent=23 // pred_region
              _
            $region39: #{tpu_custom_call.1} parent=23 // pred_fallthru
              _
          $region24: #{tpu_custom_call.1} parent=19 // pred_fallthru
            _
          %297 = vnop
        $region20: #{tpu_custom_call.1} parent=15 // pred_fallthru
          _
        // Predicated region
        $region40: #{tpu_custom_call.1} parent=15 // pred_check
          %p298 = pneg %p68
        $region41: #{tpu_custom_call.1} parent=15 // pred_check_branch
          %300 = sbr.rel (%p298) target = $region43
        $region42: #{tpu_custom_call.1} parent=15 // pred_region
          %s301 = smul.u32 3, %s16
          %p302 = scmp.lt.s32.totalorder %s301, 5
          %s303 = scalar_select %p302, %s301, 5
          %s304 = scalar_lea.vmem %s1, %s303
          %s305 = smul.u32 3, %s16
        $region43: #{tpu_custom_call.1} parent=15 // pred_fallthru
          _
      $region16: #{tpu_custom_call.1} parent=5 // pred_fallthru
        _
      %p306 = scmp.le.s32.totalorder 1, %s8
      %p307 = scmp.lt.s32.totalorder %s8, 3
      %p308 = pnand %p306, %p307
      %p309 = pneg %p308
      // Predicated region
      $region44: #{tpu_custom_call.1} parent=5 // pred_check
        _
      $region45: #{tpu_custom_call.1} parent=5 // pred_check_branch
        %311 = sbr.rel (%p308) target = $region47
      $region46: #{tpu_custom_call.1} parent=5 // pred_region
        %s312 = ssub.s32 %s8, 1
        %s313 = sand.u32 %s35, 1
        %s314 = sand.u32 %s35, 1
        %s315 = smul.addr %s314, 600
        %s316 = scalar_lea.vmem [#allocation2], %s315
        // Predicated region
        $region48: #{tpu_custom_call.1} parent=46 // pred_check
          %p317 = pneg %p48
        $region49: #{tpu_custom_call.1} parent=46 // pred_check_branch
          %319 = sbr.rel (%p317) target = $region51
        $region50: #{tpu_custom_call.1} parent=46 // pred_region
          _
        $region51: #{tpu_custom_call.1} parent=46 // pred_fallthru
          _
        %s320 = sand.u32 %s35, 1
        %s321 = sand.u32 %s35, 1
        %s322 = smul.addr %s321, 600
        %s323 = scalar_lea.vmem [#allocation2], %s322
        %p324 = pneg %p48
        %p325 = pneg %p45
        %s326 = smul.u32 3, %s18
        %p327 = scmp.lt.s32.totalorder %s326, 5
        %s328 = scalar_select %p327, %s326, 5
        %s329 = scalar_lea.vmem %s1, %s328
        %p330 = pneg %p74
        %p331 = pneg %p71
        %p332 = pneg %p102
        %p333 = pneg %p99
        %s334 = smul.u32 48, %s18
        %p335 = scmp.lt.s32.totalorder %s17, 0
        %s336 = scalar_select %p335, %s17, 0
        %p337 = scmp.lt.s32.totalorder %s334, 95
        %s338 = scalar_select %p337, %s334, 95
        %s339 = smul.addr %s338, 2
        %s340 = smul.addr %s336, 192
        %s341 = sadd.s32 %s339, %s340
        %s342 = smul.addr %s341, 8
        %s343 = scalar_lea.vmem %s2, %s342
        %s344 = smul.u32 3, %s18
        %s345 = smul.u32 3, %s18
        %p346 = scmp.lt.s32.totalorder %s345, 5
        %s347 = scalar_select %p346, %s345, 5
        %s348 = scalar_lea.vmem %s1, %s347
        %s349 = smul.u32 3, %s18
        %s350 = smul.u32 48, %s18
        %p351 = scmp.lt.s32.totalorder %s17, 0
        %s352 = scalar_select %p351, %s17, 0
        %p353 = scmp.lt.s32.totalorder %s350, 95
        %s354 = scalar_select %p353, %s350, 95
        %s355 = smul.addr %s354, 2
        %s356 = smul.addr %s352, 192
        %s357 = sadd.s32 %s355, %s356
        %s358 = smul.addr %s357, 8
        %s359 = scalar_lea.vmem %s2, %s358
        %s360 = smul.u32 48, %s18
        %v361 = vld [vmem:[%s316] sm:$0xff]
        %v362 = vld [vmem:[%s316 + $0x8] sm:$0xff]
        %v363 = vld [vmem:[%s316 + $0x10] sm:$0xff]
        %v364 = vld [vmem:[%s316 + $0x18] sm:$0xff]
        %v365 = vld [vmem:[%s316 + $0x20] sm:$0xff]
        %v366 = vld [vmem:[%s316 + $0x28] sm:$0xff]
        %v367 = vld [vmem:[%s316 + $0x30] sm:$0xff]
        %v368 = vld [vmem:[%s316 + $0x38] sm:$0xff]
        %v369 = vld [vmem:[%s316 + $0x40] sm:$0xff]
        %v370 = vld [vmem:[%s316 + $0x48] sm:$0xff]
        %v371 = vld [vmem:[%s316 + $0x50] sm:$0xff]
        %v372 = vld [vmem:[%s316 + $0x58] sm:$0xff]
        %v373 = vld [vmem:[%s316 + $0x60] sm:$0xff]
        %v374 = vld [vmem:[%s316 + $0x68] sm:$0xff]
        %v375 = vld [vmem:[%s316 + $0x70] sm:$0xff]
        %v376 = vld [vmem:[%s316 + $0x78] sm:$0xff]
        %v377 = vld [vmem:[%s316 + $0x80] sm:$0xff]
        %v378 = vld [vmem:[%s316 + $0x88] sm:$0xff]
        %v379 = vld [vmem:[%s316 + $0x90] sm:$0xff]
        %v380 = vld [vmem:[%s316 + $0x98] sm:$0xff]
        %v381 = vld [vmem:[%s316 + $0xa0] sm:$0xff]
        %v382 = vld [vmem:[%s316 + $0xa8] sm:$0xff]
        %v383 = vld [vmem:[%s316 + $0xb0] sm:$0xff]
        %v384 = vld [vmem:[%s316 + $0xb8] sm:$0xff]
        %v385 = vld [vmem:[%s316 + $0xc0] sm:$0xff]
        %v386 = vld [vmem:[%s316 + $0xc8] sm:$0xff]
        %v387 = vld [vmem:[%s316 + $0xd0] sm:$0xff]
        %v388 = vld [vmem:[%s316 + $0xd8] sm:$0xff]
        %v389 = vld [vmem:[%s316 + $0xe0] sm:$0xff]
        %v390 = vld [vmem:[%s316 + $0xe8] sm:$0xff]
        %v391 = vld [vmem:[%s316 + $0xf0] sm:$0xff]
        %v392 = vld [vmem:[%s316 + $0xf8] sm:$0xff]
        %v393 = vld [vmem:[%s316 + $0x100] sm:$0xff]
        %v394 = vld [vmem:[%s316 + $0x108] sm:$0xff]
        %v395 = vld [vmem:[%s316 + $0x110] sm:$0xff]
        %v396 = vld [vmem:[%s316 + $0x118] sm:$0xff]
        %v397 = vld [vmem:[%s316 + $0x120] sm:$0xff]
        %v398 = vld [vmem:[%s316 + $0x128] sm:$0xff]
        %v399 = vld [vmem:[%s316 + $0x130] sm:$0xff]
        %v400 = vld [vmem:[%s316 + $0x138] sm:$0xff]
        %v401 = vld [vmem:[%s316 + $0x140] sm:$0xff]
        %v402 = vld [vmem:[%s316 + $0x148] sm:$0xff]
        %v403 = vld [vmem:[%s316 + $0x150] sm:$0xff]
        %v404 = vld [vmem:[%s316 + $0x158] sm:$0xff]
        %v405 = vld [vmem:[%s316 + $0x160] sm:$0xff]
        %v406 = vld [vmem:[%s316 + $0x168] sm:$0xff]
        %v407 = vld [vmem:[%s316 + $0x170] sm:$0xff]
        %v408 = vld [vmem:[%s316 + $0x178] sm:$0xff]
        %v409 = vld [vmem:[%s316 + $0x180] sm:$0xff]
        %v410 = vld [vmem:[%s316 + $0x188] sm:$0xff]
        %v411 = vld [vmem:[%s316 + $0x190] sm:$0xff]
        %v412 = vld [vmem:[%s316 + $0x198] sm:$0xff]
        %v413 = vld [vmem:[%s316 + $0x1a0] sm:$0xff]
        %v414 = vld [vmem:[%s316 + $0x1a8] sm:$0xff]
        %v415 = vld [vmem:[%s316 + $0x1b0] sm:$0xff]
        %v416 = vld [vmem:[%s316 + $0x1b8] sm:$0xff]
        %v417 = vld [vmem:[%s316 + $0x1c0] sm:$0xff]
        %v418 = vld [vmem:[%s316 + $0x1c8] sm:$0xff]
        %v419 = vld [vmem:[%s316 + $0x1d0] sm:$0xff]
        %v420 = vld [vmem:[%s316 + $0x1d8] sm:$0xff]
        %v421 = vld [vmem:[%s316 + $0x1e0] sm:$0xff]
        %v422 = vld [vmem:[%s316 + $0x1e8] sm:$0xff]
        %v423 = vld [vmem:[%s316 + $0x1f0] sm:$0xff]
        %v424 = vld [vmem:[%s316 + $0x1f8] sm:$0xff]
        %v425 = vld [vmem:[%s316 + $0x200] sm:$0xff]
        %v426 = vld [vmem:[%s316 + $0x208] sm:$0xff]
        %v427 = vld [vmem:[%s316 + $0x210] sm:$0xff]
        %v428 = vld [vmem:[%s316 + $0x218] sm:$0xff]
        %v429 = vld [vmem:[%s316 + $0x220] sm:$0xff]
        %v430 = vld [vmem:[%s316 + $0x228] sm:$0xff]
        %v431 = vld [vmem:[%s316 + $0x230] sm:$0xff]
        %v432 = vld [vmem:[%s316 + $0x238] sm:$0xff]
        %v433 = vld [vmem:[%s316 + $0x240] sm:$0xf]
        %v434 = vld [vmem:[%s316 + $0x248] sm:$0xf]
        %v435 = vld [vmem:[%s316 + $0x250] sm:$0xf]
        %v436 = vld [vmem:[%s348] sm:$0x7]
        %v438 = vlaneseq
        %v439 = vshrl.u32 %v438, 7
        %v440 = vsub.s32 0, %v439
        %v441 = vrot.slane %v436, %v440
        %v442 = vlaneseq
        %v443 = vshrl.u32 %v442, 7
        %v444 = vsub.s32 1, %v443
        %v445 = vrot.slane %v436, %v444
        %v446 = vlaneseq
        %v447 = vshrl.u32 %v446, 7
        %v448 = vsub.s32 2, %v447
        %v449 = vrot.slane %v436, %v448
        %v453 = vmul.f32 %v361, %v441
        %v454 = vmul.f32 %v362, %v445
        %v455 = vmul.f32 %v363, %v449
        %v456 = vmul.f32 %v364, %v441
        %v457 = vmul.f32 %v365, %v445
        %v458 = vmul.f32 %v366, %v449
        %v459 = vmul.f32 %v367, %v441
        %v460 = vmul.f32 %v368, %v445
        %v461 = vmul.f32 %v369, %v449
        %v462 = vmul.f32 %v370, %v441
        %v463 = vmul.f32 %v371, %v445
        %v464 = vmul.f32 %v372, %v449
        %v465 = vmul.f32 %v373, %v441
        %v466 = vmul.f32 %v374, %v445
        %v467 = vmul.f32 %v375, %v449
        %v468 = vmul.f32 %v376, %v441
        %v469 = vmul.f32 %v377, %v445
        %v470 = vmul.f32 %v378, %v449
        %v471 = vmul.f32 %v379, %v441
        %v472 = vmul.f32 %v380, %v445
        %v473 = vmul.f32 %v381, %v449
        %v474 = vmul.f32 %v382, %v441
        %v475 = vmul.f32 %v383, %v445
        %v476 = vmul.f32 %v384, %v449
        %v477 = vmul.f32 %v385, %v441
        %v478 = vmul.f32 %v386, %v445
        %v479 = vmul.f32 %v387, %v449
        %v480 = vmul.f32 %v388, %v441
        %v481 = vmul.f32 %v389, %v445
        %v482 = vmul.f32 %v390, %v449
        %v483 = vmul.f32 %v391, %v441
        %v484 = vmul.f32 %v392, %v445
        %v485 = vmul.f32 %v393, %v449
        %v486 = vmul.f32 %v394, %v441
        %v487 = vmul.f32 %v395, %v445
        %v488 = vmul.f32 %v396, %v449
        %v489 = vmul.f32 %v397, %v441
        %v490 = vmul.f32 %v398, %v445
        %v491 = vmul.f32 %v399, %v449
        %v492 = vmul.f32 %v400, %v441
        %v493 = vmul.f32 %v401, %v445
        %v494 = vmul.f32 %v402, %v449
        %v495 = vmul.f32 %v403, %v441
        %v496 = vmul.f32 %v404, %v445
        %v497 = vmul.f32 %v405, %v449
        %v498 = vmul.f32 %v406, %v441
        %v499 = vmul.f32 %v407, %v445
        %v500 = vmul.f32 %v408, %v449
        %v501 = vmul.f32 %v409, %v441
        %v502 = vmul.f32 %v410, %v445
        %v503 = vmul.f32 %v411, %v449
        %v504 = vmul.f32 %v412, %v441
        %v505 = vmul.f32 %v413, %v445
        %v506 = vmul.f32 %v414, %v449
        %v507 = vmul.f32 %v415, %v441
        %v508 = vmul.f32 %v416, %v445
        %v509 = vmul.f32 %v417, %v449
        %v510 = vmul.f32 %v418, %v441
        %v511 = vmul.f32 %v419, %v445
        %v512 = vmul.f32 %v420, %v449
        %v513 = vmul.f32 %v421, %v441
        %v514 = vmul.f32 %v422, %v445
        %v515 = vmul.f32 %v423, %v449
        %v516 = vmul.f32 %v424, %v441
        %v517 = vmul.f32 %v425, %v445
        %v518 = vmul.f32 %v426, %v449
        %v519 = vmul.f32 %v427, %v441
        %v520 = vmul.f32 %v428, %v445
        %v521 = vmul.f32 %v429, %v449
        %v522 = vmul.f32 %v430, %v441
        %v523 = vmul.f32 %v431, %v445
        %v524 = vmul.f32 %v432, %v449
        %v525 = vmul.f32 %v433, %v441
        %v526 = vmul.f32 %v434, %v445
        %v527 = vmul.f32 %v435, %v449
        %528 = vxpose.xlu0.b32.start [1/16] %v453, 128
        %529 = vxpose.xlu0.b32.cont [2/16] %v456, 128
        %530 = vxpose.xlu0.b32.cont [3/16] %v459, 128
        %531 = vxpose.xlu0.b32.cont [4/16] %v462, 128
        %532 = vxpose.xlu0.b32.cont [5/16] %v465, 128
        %533 = vxpose.xlu0.b32.cont [6/16] %v468, 128
        %534 = vxpose.xlu0.b32.cont [7/16] %v471, 128
        %535 = vxpose.xlu0.b32.cont [8/16] %v474, 128
        %536 = vxpose.xlu0.b32.cont [9/16] %v477, 128
        %537 = vxpose.xlu0.b32.cont [10/16] %v480, 128
        %538 = vxpose.xlu0.b32.cont [11/16] %v483, 128
        %539 = vxpose.xlu0.b32.cont [12/16] %v486, 128
        %540 = vxpose.xlu0.b32.cont [13/16] %v489, 128
        %541 = vxpose.xlu0.b32.cont [14/16] %v492, 128
        %542 = vxpose.xlu0.b32.cont [15/16] %v495, 128
        %543 = vxpose.xlu0.b32.end [16/16] %v498, 128
        %v544 = vpop.trf.xlu0
        %v545 = vpop.trf.xlu0
        %v546 = vpop.trf.xlu0
        %v547 = vpop.trf.xlu0
        %v548 = vpop.trf.xlu0
        %v549 = vpop.trf.xlu0
        %v550 = vpop.trf.xlu0
        %v551 = vpop.trf.xlu0
        %v552 = vpop.trf.xlu0
        %v553 = vpop.trf.xlu0
        %v554 = vpop.trf.xlu0
        %v555 = vpop.trf.xlu0
        %v556 = vpop.trf.xlu0
        %v557 = vpop.trf.xlu0
        %v558 = vpop.trf.xlu0
        %v559 = vpop.trf.xlu0
        %560 = vxpose.xlu0.b32.start [1/16] %v454, 128
        %561 = vxpose.xlu0.b32.cont [2/16] %v457, 128
        %562 = vxpose.xlu0.b32.cont [3/16] %v460, 128
        %563 = vxpose.xlu0.b32.cont [4/16] %v463, 128
        %564 = vxpose.xlu0.b32.cont [5/16] %v466, 128
        %565 = vxpose.xlu0.b32.cont [6/16] %v469, 128
        %566 = vxpose.xlu0.b32.cont [7/16] %v472, 128
        %567 = vxpose.xlu0.b32.cont [8/16] %v475, 128
        %568 = vxpose.xlu0.b32.cont [9/16] %v478, 128
        %569 = vxpose.xlu0.b32.cont [10/16] %v481, 128
        %570 = vxpose.xlu0.b32.cont [11/16] %v484, 128
        %571 = vxpose.xlu0.b32.cont [12/16] %v487, 128
        %572 = vxpose.xlu0.b32.cont [13/16] %v490, 128
        %573 = vxpose.xlu0.b32.cont [14/16] %v493, 128
        %574 = vxpose.xlu0.b32.cont [15/16] %v496, 128
        %575 = vxpose.xlu0.b32.end [16/16] %v499, 128
        %v576 = vpop.trf.xlu0
        %v577 = vpop.trf.xlu0
        %v578 = vpop.trf.xlu0
        %v579 = vpop.trf.xlu0
        %v580 = vpop.trf.xlu0
        %v581 = vpop.trf.xlu0
        %v582 = vpop.trf.xlu0
        %v583 = vpop.trf.xlu0
        %v584 = vpop.trf.xlu0
        %v585 = vpop.trf.xlu0
        %v586 = vpop.trf.xlu0
        %v587 = vpop.trf.xlu0
        %v588 = vpop.trf.xlu0
        %v589 = vpop.trf.xlu0
        %v590 = vpop.trf.xlu0
        %v591 = vpop.trf.xlu0
        %592 = vxpose.xlu0.b32.start [1/16] %v455, 128
        %593 = vxpose.xlu0.b32.cont [2/16] %v458, 128
        %594 = vxpose.xlu0.b32.cont [3/16] %v461, 128
        %595 = vxpose.xlu0.b32.cont [4/16] %v464, 128
        %596 = vxpose.xlu0.b32.cont [5/16] %v467, 128
        %597 = vxpose.xlu0.b32.cont [6/16] %v470, 128
        %598 = vxpose.xlu0.b32.cont [7/16] %v473, 128
        %599 = vxpose.xlu0.b32.cont [8/16] %v476, 128
        %600 = vxpose.xlu0.b32.cont [9/16] %v479, 128
        %601 = vxpose.xlu0.b32.cont [10/16] %v482, 128
        %602 = vxpose.xlu0.b32.cont [11/16] %v485, 128
        %603 = vxpose.xlu0.b32.cont [12/16] %v488, 128
        %604 = vxpose.xlu0.b32.cont [13/16] %v491, 128
        %605 = vxpose.xlu0.b32.cont [14/16] %v494, 128
        %606 = vxpose.xlu0.b32.cont [15/16] %v497, 128
        %607 = vxpose.xlu0.b32.end [16/16] %v500, 128
        %v608 = vpop.trf.xlu0
        %v609 = vpop.trf.xlu0
        %v610 = vpop.trf.xlu0
        %v611 = vpop.trf.xlu0
        %v612 = vpop.trf.xlu0
        %v613 = vpop.trf.xlu0
        %v614 = vpop.trf.xlu0
        %v615 = vpop.trf.xlu0
        %v616 = vpop.trf.xlu0
        %v617 = vpop.trf.xlu0
        %v618 = vpop.trf.xlu0
        %v619 = vpop.trf.xlu0
        %v620 = vpop.trf.xlu0
        %v621 = vpop.trf.xlu0
        %v622 = vpop.trf.xlu0
        %v623 = vpop.trf.xlu0
        %624 = vxpose.xlu0.b32.start [1/16] %v501, 128
        %625 = vxpose.xlu0.b32.cont [2/16] %v504, 128
        %626 = vxpose.xlu0.b32.cont [3/16] %v507, 128
        %627 = vxpose.xlu0.b32.cont [4/16] %v510, 128
        %628 = vxpose.xlu0.b32.cont [5/16] %v513, 128
        %629 = vxpose.xlu0.b32.cont [6/16] %v516, 128
        %630 = vxpose.xlu0.b32.cont [7/16] %v519, 128
        %631 = vxpose.xlu0.b32.cont [8/16] %v522, 128
        %632 = vxpose.xlu0.b32.cont [9/16] %v525, 128
        %633 = vxpose.xlu0.b32.cont [10/16] 0.0, 128
        %634 = vxpose.xlu0.b32.cont [11/16] 0.0, 128
        %635 = vxpose.xlu0.b32.cont [12/16] 0.0, 128
        %636 = vxpose.xlu0.b32.cont [13/16] 0.0, 128
        %637 = vxpose.xlu0.b32.cont [14/16] 0.0, 128
        %638 = vxpose.xlu0.b32.cont [15/16] 0.0, 128
        %639 = vxpose.xlu0.b32.end [16/16] 0.0, 128
        %v640 = vpop.trf.xlu0
        %v641 = vpop.trf.xlu0
        %v642 = vpop.trf.xlu0
        %v643 = vpop.trf.xlu0
        %v644 = vpop.trf.xlu0
        %v645 = vpop.trf.xlu0
        %v646 = vpop.trf.xlu0
        %v647 = vpop.trf.xlu0
        %v648 = vpop.trf.xlu0
        %v649 = vpop.trf.xlu0
        %v650 = vpop.trf.xlu0
        %v651 = vpop.trf.xlu0
        %v652 = vpop.trf.xlu0
        %v653 = vpop.trf.xlu0
        %v654 = vpop.trf.xlu0
        %v655 = vpop.trf.xlu0
        %656 = vxpose.xlu0.b32.start [1/16] %v502, 128
        %657 = vxpose.xlu0.b32.cont [2/16] %v505, 128
        %658 = vxpose.xlu0.b32.cont [3/16] %v508, 128
        %659 = vxpose.xlu0.b32.cont [4/16] %v511, 128
        %660 = vxpose.xlu0.b32.cont [5/16] %v514, 128
        %661 = vxpose.xlu0.b32.cont [6/16] %v517, 128
        %662 = vxpose.xlu0.b32.cont [7/16] %v520, 128
        %663 = vxpose.xlu0.b32.cont [8/16] %v523, 128
        %664 = vxpose.xlu0.b32.cont [9/16] %v526, 128
        %665 = vxpose.xlu0.b32.cont [10/16] 0.0, 128
        %666 = vxpose.xlu0.b32.cont [11/16] 0.0, 128
        %667 = vxpose.xlu0.b32.cont [12/16] 0.0, 128
        %668 = vxpose.xlu0.b32.cont [13/16] 0.0, 128
        %669 = vxpose.xlu0.b32.cont [14/16] 0.0, 128
        %670 = vxpose.xlu0.b32.cont [15/16] 0.0, 128
        %671 = vxpose.xlu0.b32.end [16/16] 0.0, 128
        %v672 = vpop.trf.xlu0
        %v673 = vpop.trf.xlu0
        %v674 = vpop.trf.xlu0
        %v675 = vpop.trf.xlu0
        %v676 = vpop.trf.xlu0
        %v677 = vpop.trf.xlu0
        %v678 = vpop.trf.xlu0
        %v679 = vpop.trf.xlu0
        %v680 = vpop.trf.xlu0
        %v681 = vpop.trf.xlu0
        %v682 = vpop.trf.xlu0
        %v683 = vpop.trf.xlu0
        %v684 = vpop.trf.xlu0
        %v685 = vpop.trf.xlu0
        %v686 = vpop.trf.xlu0
        %v687 = vpop.trf.xlu0
        %688 = vxpose.xlu0.b32.start [1/16] %v503, 128
        %689 = vxpose.xlu0.b32.cont [2/16] %v506, 128
        %690 = vxpose.xlu0.b32.cont [3/16] %v509, 128
        %691 = vxpose.xlu0.b32.cont [4/16] %v512, 128
        %692 = vxpose.xlu0.b32.cont [5/16] %v515, 128
        %693 = vxpose.xlu0.b32.cont [6/16] %v518, 128
        %694 = vxpose.xlu0.b32.cont [7/16] %v521, 128
        %695 = vxpose.xlu0.b32.cont [8/16] %v524, 128
        %696 = vxpose.xlu0.b32.cont [9/16] %v527, 128
        %697 = vxpose.xlu0.b32.cont [10/16] 0.0, 128
        %698 = vxpose.xlu0.b32.cont [11/16] 0.0, 128
        %699 = vxpose.xlu0.b32.cont [12/16] 0.0, 128
        %700 = vxpose.xlu0.b32.cont [13/16] 0.0, 128
        %701 = vxpose.xlu0.b32.cont [14/16] 0.0, 128
        %702 = vxpose.xlu0.b32.cont [15/16] 0.0, 128
        %703 = vxpose.xlu0.b32.end [16/16] 0.0, 128
        %v704 = vpop.trf.xlu0
        %v705 = vpop.trf.xlu0
        %v706 = vpop.trf.xlu0
        %v707 = vpop.trf.xlu0
        %v708 = vpop.trf.xlu0
        %v709 = vpop.trf.xlu0
        %v710 = vpop.trf.xlu0
        %v711 = vpop.trf.xlu0
        %v712 = vpop.trf.xlu0
        %v713 = vpop.trf.xlu0
        %v714 = vpop.trf.xlu0
        %v715 = vpop.trf.xlu0
        %v716 = vpop.trf.xlu0
        %v717 = vpop.trf.xlu0
        %v718 = vpop.trf.xlu0
        %v719 = vpop.trf.xlu0
        %720 = vst [vmem:[%s359] sm:$0xff] %v544
        %vm721 = vcmask 556032
        %722 = vst.msk [vmem:[%s359 + $0x8] sm:$0xff] %vm721, %v640
        %723 = vst [vmem:[%s359 + $0x10] sm:$0xff] %v545
        %724 = vst.msk [vmem:[%s359 + $0x18] sm:$0xff] %vm721, %v641
        %725 = vst [vmem:[%s359 + $0x20] sm:$0xff] %v546
        %726 = vst.msk [vmem:[%s359 + $0x28] sm:$0xff] %vm721, %v642
        %727 = vst [vmem:[%s359 + $0x30] sm:$0xff] %v547
        %728 = vst.msk [vmem:[%s359 + $0x38] sm:$0xff] %vm721, %v643
        %729 = vst [vmem:[%s359 + $0x40] sm:$0xff] %v548
        %730 = vst.msk [vmem:[%s359 + $0x48] sm:$0xff] %vm721, %v644
        %731 = vst [vmem:[%s359 + $0x50] sm:$0xff] %v549
        %732 = vst.msk [vmem:[%s359 + $0x58] sm:$0xff] %vm721, %v645
        %733 = vst [vmem:[%s359 + $0x60] sm:$0xff] %v550
        %734 = vst.msk [vmem:[%s359 + $0x68] sm:$0xff] %vm721, %v646
        %735 = vst [vmem:[%s359 + $0x70] sm:$0xff] %v551
        %736 = vst.msk [vmem:[%s359 + $0x78] sm:$0xff] %vm721, %v647
        %737 = vst [vmem:[%s359 + $0x80] sm:$0xff] %v552
        %738 = vst.msk [vmem:[%s359 + $0x88] sm:$0xff] %vm721, %v648
        %739 = vst [vmem:[%s359 + $0x90] sm:$0xff] %v553
        %740 = vst.msk [vmem:[%s359 + $0x98] sm:$0xff] %vm721, %v649
        %741 = vst [vmem:[%s359 + $0xa0] sm:$0xff] %v554
        %742 = vst.msk [vmem:[%s359 + $0xa8] sm:$0xff] %vm721, %v650
        %743 = vst [vmem:[%s359 + $0xb0] sm:$0xff] %v555
        %744 = vst.msk [vmem:[%s359 + $0xb8] sm:$0xff] %vm721, %v651
        %745 = vst [vmem:[%s359 + $0xc0] sm:$0xff] %v556
        %746 = vst.msk [vmem:[%s359 + $0xc8] sm:$0xff] %vm721, %v652
        %747 = vst [vmem:[%s359 + $0xd0] sm:$0xff] %v557
        %748 = vst.msk [vmem:[%s359 + $0xd8] sm:$0xff] %vm721, %v653
        %749 = vst [vmem:[%s359 + $0xe0] sm:$0xff] %v558
        %750 = vst.msk [vmem:[%s359 + $0xe8] sm:$0xff] %vm721, %v654
        %751 = vst [vmem:[%s359 + $0xf0] sm:$0xff] %v559
        %752 = vst.msk [vmem:[%s359 + $0xf8] sm:$0xff] %vm721, %v655
        %753 = vst [vmem:[%s359 + $0x100] sm:$0xff] %v576
        %754 = vst.msk [vmem:[%s359 + $0x108] sm:$0xff] %vm721, %v672
        %755 = vst [vmem:[%s359 + $0x110] sm:$0xff] %v577
        %756 = vst.msk [vmem:[%s359 + $0x118] sm:$0xff] %vm721, %v673
        %757 = vst [vmem:[%s359 + $0x120] sm:$0xff] %v578
        %758 = vst.msk [vmem:[%s359 + $0x128] sm:$0xff] %vm721, %v674
        %759 = vst [vmem:[%s359 + $0x130] sm:$0xff] %v579
        %760 = vst.msk [vmem:[%s359 + $0x138] sm:$0xff] %vm721, %v675
        %761 = vst [vmem:[%s359 + $0x140] sm:$0xff] %v580
        %762 = vst.msk [vmem:[%s359 + $0x148] sm:$0xff] %vm721, %v676
        %763 = vst [vmem:[%s359 + $0x150] sm:$0xff] %v581
        %764 = vst.msk [vmem:[%s359 + $0x158] sm:$0xff] %vm721, %v677
        %765 = vst [vmem:[%s359 + $0x160] sm:$0xff] %v582
        %766 = vst.msk [vmem:[%s359 + $0x168] sm:$0xff] %vm721, %v678
        %767 = vst [vmem:[%s359 + $0x170] sm:$0xff] %v583
        %768 = vst.msk [vmem:[%s359 + $0x178] sm:$0xff] %vm721, %v679
        %769 = vst [vmem:[%s359 + $0x180] sm:$0xff] %v584
        %770 = vst.msk [vmem:[%s359 + $0x188] sm:$0xff] %vm721, %v680
        %771 = vst [vmem:[%s359 + $0x190] sm:$0xff] %v585
        %772 = vst.msk [vmem:[%s359 + $0x198] sm:$0xff] %vm721, %v681
        %773 = vst [vmem:[%s359 + $0x1a0] sm:$0xff] %v586
        %774 = vst.msk [vmem:[%s359 + $0x1a8] sm:$0xff] %vm721, %v682
        %775 = vst [vmem:[%s359 + $0x1b0] sm:$0xff] %v587
        %776 = vst.msk [vmem:[%s359 + $0x1b8] sm:$0xff] %vm721, %v683
        %777 = vst [vmem:[%s359 + $0x1c0] sm:$0xff] %v588
        %778 = vst.msk [vmem:[%s359 + $0x1c8] sm:$0xff] %vm721, %v684
        %779 = vst [vmem:[%s359 + $0x1d0] sm:$0xff] %v589
        %780 = vst.msk [vmem:[%s359 + $0x1d8] sm:$0xff] %vm721, %v685
        %781 = vst [vmem:[%s359 + $0x1e0] sm:$0xff] %v590
        %782 = vst.msk [vmem:[%s359 + $0x1e8] sm:$0xff] %vm721, %v686
        %783 = vst [vmem:[%s359 + $0x1f0] sm:$0xff] %v591
        %784 = vst.msk [vmem:[%s359 + $0x1f8] sm:$0xff] %vm721, %v687
        %785 = vst [vmem:[%s359 + $0x200] sm:$0xff] %v608
        %786 = vst.msk [vmem:[%s359 + $0x208] sm:$0xff] %vm721, %v704
        %787 = vst [vmem:[%s359 + $0x210] sm:$0xff] %v609
        %788 = vst.msk [vmem:[%s359 + $0x218] sm:$0xff] %vm721, %v705
        %789 = vst [vmem:[%s359 + $0x220] sm:$0xff] %v610
        %790 = vst.msk [vmem:[%s359 + $0x228] sm:$0xff] %vm721, %v706
        %791 = vst [vmem:[%s359 + $0x230] sm:$0xff] %v611
        %792 = vst.msk [vmem:[%s359 + $0x238] sm:$0xff] %vm721, %v707
        %793 = vst [vmem:[%s359 + $0x240] sm:$0xff] %v612
        %794 = vst.msk [vmem:[%s359 + $0x248] sm:$0xff] %vm721, %v708
        %795 = vst [vmem:[%s359 + $0x250] sm:$0xff] %v613
        %796 = vst.msk [vmem:[%s359 + $0x258] sm:$0xff] %vm721, %v709
        %797 = vst [vmem:[%s359 + $0x260] sm:$0xff] %v614
        %798 = vst.msk [vmem:[%s359 + $0x268] sm:$0xff] %vm721, %v710
        %799 = vst [vmem:[%s359 + $0x270] sm:$0xff] %v615
        %800 = vst.msk [vmem:[%s359 + $0x278] sm:$0xff] %vm721, %v711
        %801 = vst [vmem:[%s359 + $0x280] sm:$0xff] %v616
        %802 = vst.msk [vmem:[%s359 + $0x288] sm:$0xff] %vm721, %v712
        %803 = vst [vmem:[%s359 + $0x290] sm:$0xff] %v617
        %804 = vst.msk [vmem:[%s359 + $0x298] sm:$0xff] %vm721, %v713
        %805 = vst [vmem:[%s359 + $0x2a0] sm:$0xff] %v618
        %806 = vst.msk [vmem:[%s359 + $0x2a8] sm:$0xff] %vm721, %v714
        %807 = vst [vmem:[%s359 + $0x2b0] sm:$0xff] %v619
        %808 = vst.msk [vmem:[%s359 + $0x2b8] sm:$0xff] %vm721, %v715
        %809 = vst [vmem:[%s359 + $0x2c0] sm:$0xff] %v620
        %810 = vst.msk [vmem:[%s359 + $0x2c8] sm:$0xff] %vm721, %v716
        %811 = vst [vmem:[%s359 + $0x2d0] sm:$0xff] %v621
        %812 = vst.msk [vmem:[%s359 + $0x2d8] sm:$0xff] %vm721, %v717
        %813 = vst [vmem:[%s359 + $0x2e0] sm:$0xff] %v622
        %814 = vst.msk [vmem:[%s359 + $0x2e8] sm:$0xff] %vm721, %v718
        %815 = vst [vmem:[%s359 + $0x2f0] sm:$0xff] %v623
        %816 = vst.msk [vmem:[%s359 + $0x2f8] sm:$0xff] %vm721, %v719
        %s817 = smul.u32 48, %s18
        %p818 = scmp.lt.s32.totalorder %s17, 0
        %s819 = scalar_select %p818, %s17, 0
        %p820 = scmp.lt.s32.totalorder %s817, 95
        %s821 = scalar_select %p820, %s817, 95
        %s822 = smul.addr %s821, 2
        %s823 = smul.addr %s819, 192
        %s824 = sadd.s32 %s822, %s823
        %s825 = smul.addr %s824, 8
        %s826 = scalar_lea.vmem %s2, %s825
        // Predicated region
        $region52: #{tpu_custom_call.1} parent=46 // pred_check
          %p827 = pneg %p99
        $region53: #{tpu_custom_call.1} parent=46 // pred_check_branch
          %829 = sbr.rel (%p827) target = $region55
        $region54: #{tpu_custom_call.1} parent=46 // pred_region
          %s830 = smul.u32 48, %s18
        $region55: #{tpu_custom_call.1} parent=46 // pred_fallthru
          _
      $region47: #{tpu_custom_call.1} parent=5 // pred_fallthru
        _
      %p831 = scmp.le.s32.totalorder 2, %s8
      // Predicated region
      $region56: #{tpu_custom_call.1} parent=5 // pred_check
        %p832 = pneg %p831
      $region57: #{tpu_custom_call.1} parent=5 // pred_check_branch
        %834 = sbr.rel (%p832) target = $region59
      $region58: #{tpu_custom_call.1} parent=5 // pred_region
        %s835 = ssub.s32 %s8, 2
        // Predicated region
        $region60: #{tpu_custom_call.1} parent=58 // pred_check
          %p836 = pneg %p105
        $region61: #{tpu_custom_call.1} parent=58 // pred_check_branch
          %838 = sbr.rel (%p836) target = $region63
        $region62: #{tpu_custom_call.1} parent=58 // pred_region
          %s839 = smul.u32 48, %s20
          %p840 = scmp.lt.s32.totalorder %s19, 0
          %s841 = scalar_select %p840, %s19, 0
          %p842 = scmp.lt.s32.totalorder %s839, 95
          %s843 = scalar_select %p842, %s839, 95
          %s844 = smul.addr %s843, 2
          %s845 = smul.addr %s841, 192
          %s846 = sadd.s32 %s844, %s845
          %s847 = smul.addr %s846, 8
          %s848 = scalar_lea.vmem %s2, %s847
        $region63: #{tpu_custom_call.1} parent=58 // pred_fallthru
          _
      $region59: #{tpu_custom_call.1} parent=5 // pred_fallthru
        _
    $region6: #{tpu_custom_call.1} parent=1 // loop_footer
      %s12 = sadd.s32 1, %s8
    $region7: #{tpu_custom_call.1} parent=1 // loop_footer_branch
      %7 = sbr.rel target = $region3
    $region8: #{tpu_custom_call.1} parent=1 // loop_exit
      _

</llo_original>
